<compile_context>
chip_gen: v6e
topology: v6e:2x2x1
jax: 0.10.0
libtpu: 0.0.40
codegen_flags: <defaults>
</compile_context>

<pallas_src>
import functools

import jax
import jax.numpy as jnp
from jax.experimental import pallas as pl
from jax.experimental.pallas import tpu as pltpu

PARAMS = (1e-05, 0.001, 1e-05, 0.01, 1e-07)
_CLIP_LO, _CLIP_HI = 1e-30, 1.0

_VMEM = pltpu.MemorySpace.VMEM
_SMEM = pltpu.MemorySpace.SMEM


def _softmax_padded(logits, o_real):
    """Row softmax over the first `o_real` columns of lane-padded logits.

    Padded columns (>= o_real) are masked to -inf so they contribute exactly 0 to the
    normalizer; the divide uses the EUP approx reciprocal (off the VALU critical path).
    """
    if o_real < logits.shape[1]:
        col = jax.lax.broadcasted_iota(jnp.int32, logits.shape, 1)
        logits = jnp.where(col < o_real, logits, -jnp.inf)
    m = jnp.max(logits, axis=1, keepdims=True)
    e = jnp.exp(logits - m)
    return e * pl.reciprocal(jnp.sum(e, axis=1, keepdims=True), approx=True)


# --------------------------------------------------------------------------
# Kernel A: inference only -> softmax(x @ beta_padded)   (lane-dense output)
# --------------------------------------------------------------------------
def _infer_kernel(x_ref, beta_ref, out_ref, *, o_real):
    logits = jnp.dot(x_ref[...], beta_ref[...], preferred_element_type=jnp.float32)
    out_ref[...] = _softmax_padded(logits, o_real)


@functools.partial(jax.jit, static_argnums=(2,))
def crlr_infer(x, beta_p, o_real):
    B = x.shape[0]
    Op = beta_p.shape[1]
    out = pl.pallas_call(
        functools.partial(_infer_kernel, o_real=o_real),
        out_shape=jax.ShapeDtypeStruct((B, Op), jnp.float32),
        in_specs=[pl.BlockSpec(memory_space=_VMEM),
                  pl.BlockSpec(memory_space=_VMEM)],
        out_specs=pl.BlockSpec(memory_space=_VMEM),
    )(x, beta_p)
    return out[:, :o_real]


# --------------------------------------------------------------------------
# Kernel B: fused matmul + softmax + clip + weighted CE + L2/L1/(sum-1)^2 regularizers
#           outputs: clipped probabilities (VMEM, lane-dense) and scalar loss (SMEM)
# label_onehot arrives zero-padded to the padded width, so padded columns contribute
# 0 * log(1e-30) = 0 to the CE term; zero-padded beta contributes 0 to the regularizers.
# --------------------------------------------------------------------------
def _full_loss_kernel(x_ref, beta_ref, label_ref, w_ref, out_ref, loss_ref, *, o_real):
    p0, p1, p2, p3 = PARAMS[0], PARAMS[1], PARAMS[2], PARAMS[3]
    beta = beta_ref[...]
    logits = jnp.dot(x_ref[...], beta, preferred_element_type=jnp.float32)
    out = jnp.clip(_softmax_padded(logits, o_real), _CLIP_LO, _CLIP_HI)     # (B, O_pad)
    out_ref[...] = out

    W = w_ref[...] * w_ref[...]                                             # (B, 1)
    rowsum = jnp.sum(label_ref[...] * jnp.log(out), axis=1, keepdims=True)  # (B, 1)
    ce = -jnp.sum(W * rowsum)
    reg = (p0 * jnp.sum(W * W)
           + p1 * jnp.sum(beta * beta)
           + p2 * jnp.sum(jnp.abs(beta))
           + p3 * (jnp.sum(W) - 1.0) ** 2)
    loss_ref[0, 0] = ce + reg


@functools.partial(jax.jit, static_argnums=(4,))
def crlr_full_loss(x, beta_p, label_onehot, w_col, o_real):
    B = x.shape[0]
    Op = beta_p.shape[1]
    lab = label_onehot.astype(jnp.float32)
    if Op > o_real:
        lab = jnp.pad(lab, ((0, 0), (0, Op - o_real)))
    out, loss = pl.pallas_call(
        functools.partial(_full_loss_kernel, o_real=o_real),
        out_shape=(jax.ShapeDtypeStruct((B, Op), jnp.float32),
                   jax.ShapeDtypeStruct((1, 1), jnp.float32)),
        in_specs=[pl.BlockSpec(memory_space=_VMEM)] * 4,
        out_specs=(pl.BlockSpec(memory_space=_VMEM),
                   pl.BlockSpec(memory_space=_SMEM)),
    )(x, beta_p, lab, w_col)
    return out[:, :o_real], loss[0, 0]


# --------------------------------------------------------------------------
# Kernel C: fused matmul + softmax + clip + causal-balancing loss over `steps` columns
#   Reference per column i in [index, index+steps):
#     t = x[:, i]; x_copy = x with col i zeroed
#     calc(xc, y) = (xc^T @ (W*y)) / (W^T y + eps);  loss += p4 * ||calc(t) - calc(1-t)||^2
#   Band formulation (no per-step loop):
#     sel[s, j]  = 1 iff j == index + s                         (steps, D) iota mask
#     tw_t       = sel @ (W*x)^T  (trans-B dot)  = W*t per step (steps, B)
#     num1       = tw_t @ x                                     (steps, D)
#     d1         = row-sum(tw_t) = W . t                        (steps, 1)
#     base       = sum_b W_b x_b (hoisted)                      (1, D)
#     num2       = base - num1,   d2 = S - d1
#     diff       = num1/(d1+eps) - num2/(d2+eps), treated column zeroed via sel
# --------------------------------------------------------------------------
def _causal_loss_kernel(x_ref, beta_ref, w_ref, out_ref, loss_ref, *, index, steps, o_real):
    p4 = PARAMS[4]
    eps = 1e-05
    x = x_ref[...]                                                       # (B, D)
    logits = jnp.dot(x, beta_ref[...], preferred_element_type=jnp.float32)
    out_ref[...] = jnp.clip(_softmax_padded(logits, o_real), _CLIP_LO, _CLIP_HI)

    W = w_ref[...] * w_ref[...]                                          # (B, 1)
    xw = x * W                                                           # (B, D)
    base = jnp.sum(xw, axis=0, keepdims=True)                            # (1, D)
    S = jnp.sum(W, axis=0, keepdims=True)                                # (1, 1)

    D = x.shape[1]
    row_s = jax.lax.broadcasted_iota(jnp.int32, (steps, D), 0)
    col_d = jax.lax.broadcasted_iota(jnp.int32, (steps, D), 1)
    sel_bool = col_d == (row_s + index)                                  # (steps, D)
    sel = sel_bool.astype(jnp.float32)

    # tw_t[s, b] = W_b * x[b, index+s]   (MXU, contraction over D on both operands)
    tw_t = jax.lax.dot_general(sel, xw, (((1,), (1,)), ((), ())),
                               preferred_element_type=jnp.float32)       # (steps, B)
    num1 = jnp.dot(tw_t, x, preferred_element_type=jnp.float32)          # (steps, D)
    d1 = jnp.sum(tw_t, axis=1, keepdims=True)                            # (steps, 1)
    num2 = base - num1                                                   # (steps, D)
    # Exact divides: (steps,1) scalars, off the critical path; avoids approx-recip
    # error feeding a cancellation-prone difference.
    diff = num1 / (d1 + eps) - num2 / ((S - d1) + eps)
    diff = jnp.where(sel_bool, 0.0, diff)                                # zero treated column
    loss_ref[0, 0] = p4 * jnp.sum(diff * diff)


@functools.partial(jax.jit, static_argnums=(3, 4, 5))
def crlr_causal_loss(x, beta_p, w_col, index, steps, o_real):
    B = x.shape[0]
    Op = beta_p.shape[1]
    kernel = functools.partial(_causal_loss_kernel, index=index, steps=steps, o_real=o_real)
    out, loss = pl.pallas_call(
        kernel,
        out_shape=(jax.ShapeDtypeStruct((B, Op), jnp.float32),
                   jax.ShapeDtypeStruct((1, 1), jnp.float32)),
        in_specs=[pl.BlockSpec(memory_space=_VMEM)] * 3,
        out_specs=(pl.BlockSpec(memory_space=_VMEM),
                   pl.BlockSpec(memory_space=_SMEM)),
    )(x, beta_p, w_col)
    return out[:, :o_real], loss[0, 0]


# --------------------------------------------------------------------------
# Module wrapper (parameter setup + branch dispatch = plain-Python glue only)
# --------------------------------------------------------------------------
class CRLRPallas:
    def __init__(self, config, key):
        k1, k2 = jax.random.split(key)
        B = config["batch_size"]
        D = config["input_size"] * config["bins"]
        O = config["output_size"]
        self.O = O
        self.O_pad = ((O + 127) // 128) * 128
        self.w = jax.random.normal(k1, (B,), jnp.float32) / 10.0
        self.beta = jax.random.normal(k2, (D, O), jnp.float32) / 10.0
        # Pre-materialized kernel operands (hoisted casts / reshape / lane padding).
        # NOTE: if w/beta were trained, refresh these alongside the parameters.
        self.w_col = self.w.reshape(B, 1).astype(jnp.float32)
        self.beta_p = jnp.pad(self.beta.astype(jnp.float32), ((0, 0), (0, self.O_pad - O)))
        self.params = list(PARAMS)
        self.steps = config["steps"]

    def forward(self, x, label_onehot=None, index=None):
        x = jnp.asarray(x, jnp.float32)
        if label_onehot is None:
            return crlr_infer(x, self.beta_p, self.O)
        if index is None:
            return crlr_full_loss(x, self.beta_p, label_onehot, self.w_col, self.O)
        return crlr_causal_loss(x, self.beta_p, self.w_col, int(index), int(self.steps), self.O)


# --------------------------------------------------------------------------
# Pure-JAX reference (mirrors the PyTorch code) for verification
# --------------------------------------------------------------------------
def ref_forward(x, w, beta, steps, label_onehot=None, index=None):
    x = x.astype(jnp.float32)
    out = jax.nn.softmax(x @ beta, axis=1)
    if label_onehot is None:
        return out
    out = jnp.clip(out, _CLIP_LO, _CLIP_HI)
    W = w * w
    if index is None:
        loss = -jnp.sum(W * jnp.sum(label_onehot * jnp.log(out), axis=1))
        loss = (loss + PARAMS[0] * jnp.sum(W ** 2) + PARAMS[1] * jnp.sum(beta ** 2)
                + PARAMS[2] * jnp.sum(jnp.abs(beta)) + PARAMS[3] * (jnp.sum(W) - 1.0) ** 2)
        return out, loss
    loss = jnp.float32(0.0)
    eps = 1e-05
    for i in range(index, index + steps):
        t = x[:, i]
        xc = x.at[:, i].set(0.0)
        calc = lambda xx, yy: (xx.T @ (W * yy)) / (W @ yy + eps)
        d = calc(xc, t) - calc(xc, 1.0 - t)
        loss = loss + PARAMS[4] * jnp.sum(d * d)
    return out, loss


if __name__ == "__main__":
    config = {"batch_size": 8, "input_size": 8, "bins": 4, "output_size": 4, "steps": 2}
    key = jax.random.PRNGKey(0)
    k_model, k_x, k_lbl = jax.random.split(key, 3)

    model = CRLRPallas(config, k_model)

    B = config["batch_size"]
    D = config["input_size"] * config["bins"]
    O = config["output_size"]
    # Binned/binary-style features, like the PyTorch pipeline feeds this model.
    x = (jax.random.uniform(k_x, (B, D)) > 0.5).astype(jnp.float32)
    labels = jax.random.randint(k_lbl, (B,), 0, O)
    label_onehot = jax.nn.one_hot(labels, O, dtype=jnp.float32)

    # Branch 1: inference only
    out = jax.block_until_ready(model.forward(x))
    # Branch 2: weighted CE + regularizers (single fused kernel)
    out2, loss_full = jax.block_until_ready(model.forward(x, label_onehot))
    # Branch 3: causal balancing loss over columns [index, index+steps)
    out3, loss_causal = jax.block_until_ready(model.forward(x, label_onehot, index=3))

    # Verify against pure-JAX reference. Output tolerances allow for the EUP approx
    # reciprocal in softmax (rel err ~1e-4); the causal loss now uses exact divides.
    ref_out = ref_forward(x, model.w, model.beta, model.steps)
    ref_out2, ref_loss_full = ref_forward(x, model.w, model.beta, model.steps, label_onehot)
    ref_out3, ref_loss_causal = ref_forward(x, model.w, model.beta, model.steps,
                                            label_onehot, index=3)

    assert out.shape == (B, O) and out2.shape == (B, O) and out3.shape == (B, O)
    assert jnp.allclose(out, ref_out, atol=2e-3, rtol=2e-3)
    assert jnp.allclose(out2, ref_out2, atol=2e-3, rtol=2e-3)
    assert jnp.allclose(out3, ref_out3, atol=2e-3, rtol=2e-3)
    assert jnp.allclose(loss_full, ref_loss_full, rtol=1e-2, atol=1e-5)
    assert jnp.allclose(loss_causal, ref_loss_causal, rtol=2e-3, atol=1e-9)

    print("KERNEL_OK")
</pallas_src>

<mosaic_0001>
module attributes {stable_mosaic.version = 11 : i64} {
  func.func @_infer_kernel(%arg0: memref<8x32xf32, #tpu.memory_space<vmem>>, %arg1: memref<32x128xf32, #tpu.memory_space<vmem>>, %arg2: memref<8x128xf32, #tpu.memory_space<vmem>>) attributes {dimension_semantics = [], scalar_prefetch = 0 : i64, scratch_operands = 0 : i64, tpu.core_type = #tpu.core_type<tc>} {
    %c0 = arith.constant 0 : index
    %c0_0 = arith.constant 0 : index
    %0 = vector.load %arg0[%c0, %c0_0] : memref<8x32xf32, #tpu.memory_space<vmem>>, vector<8x32xf32>
    %c0_1 = arith.constant 0 : index
    %c0_2 = arith.constant 0 : index
    %1 = vector.load %arg1[%c0_1, %c0_2] : memref<32x128xf32, #tpu.memory_space<vmem>>, vector<32x128xf32>
    %cst = arith.constant dense<0.000000e+00> : vector<8x128xf32>
    %2 = tpu.matmul %0, %1, %cst {dimension_numbers = #tpu.dot_dimension_numbers<[1], [0], [0], [1], [0, 0, 1, 1], [], []>} : vector<8x32xf32>, vector<32x128xf32>, vector<8x128xf32> -> vector<8x128xf32>
    %3 = tpu.iota {dimensions = array<i32: 1>} : vector<8x128xi32>
    %c4_i32 = arith.constant 4 : i32
    %4 = vector.broadcast %c4_i32 : i32 to vector<8x128xi32>
    %5 = arith.cmpi slt, %3, %4 : vector<8x128xi32>
    %cst_3 = arith.constant 0xFF800000 : f32
    %6 = vector.broadcast %cst_3 : f32 to vector<8x128xf32>
    %7 = arith.select %5, %2, %6 : vector<8x128xi1>, vector<8x128xf32>
    %cst_4 = arith.constant dense<0xFF800000> : vector<8xf32>
    %8 = vector.multi_reduction <maximumf>, %7, %cst_4 [1] : vector<8x128xf32> to vector<8xf32>
    %9 = vector.shape_cast %8 : vector<8xf32> to vector<8x1xf32>
    %10 = vector.broadcast %9 : vector<8x1xf32> to vector<8x128xf32>
    %11 = arith.subf %7, %10 : vector<8x128xf32>
    %12 = math.exp %11 : vector<8x128xf32>
    %cst_5 = arith.constant dense<0.000000e+00> : vector<8xf32>
    %13 = vector.multi_reduction <add>, %12, %cst_5 [1] : vector<8x128xf32> to vector<8xf32>
    %14 = vector.shape_cast %13 : vector<8xf32> to vector<8x1xf32>
    %15 = tpu.reciprocal %14 {approx = true} : vector<8x1xf32> -> vector<8x1xf32>
    %16 = vector.broadcast %15 : vector<8x1xf32> to vector<8x128xf32>
    %17 = arith.mulf %12, %16 : vector<8x128xf32>
    %c0_6 = arith.constant 0 : index
    %c0_7 = arith.constant 0 : index
    %18 = vector.load %arg2[%c0_6, %c0_7] : memref<8x128xf32, #tpu.memory_space<vmem>>, vector<8x128xf32>
    tpu.vector_store %arg2[%c0_6, %c0_7], %17 {strides = array<i32>} : memref<8x128xf32, #tpu.memory_space<vmem>>, vector<8x128xf32>,
    return
  }
}

</mosaic_0001>

<llo_original>
// kernel: crlr_infer.1
$region0: #{crlr_infer.1}
  #allocation0 [shape = 'u32[]', space=smem, size = 0x4, offset = 0x4, fixed_abs, tag = 'smem constant byte address 0x4 - core index']
  #allocation1 [shape = 'u32[144,128]{1,0:T(1,128)}', space=vmem, size = 0x12000, scoped, tag = 'internal scratch']
  %s0 = inlined_call_operand.hbm [shape: f32[8,32], index: 0, kind: input, shape index: {}]
  %s1 = inlined_call_operand.hbm [shape: f32[32,128], index: 1, kind: input, shape index: {}]
  %s2 = inlined_call_operand.vmem [shape: f32[8,128], index: 2, kind: output, shape index: {}]
  %s3 = sld [smem:[#allocation0]]
  $region26: #{crlr_infer.1} parent=0
    _
  %s5 = ssub.s32 1, %s3
  %s6 = scalar_select 0, %s5, %s3
  $region1: #{crlr_infer.1} parent=0
    #allocation2 [shape = 'u8[4096]{0}', space=vmem, size = 0x1000, scoped, tag = 'input window, operand 0, single buffered']
    #allocation3 [shape = 's32[1]{0}', space=sflag, size = 0x4, scoped, tag = 'scoped memory for crlr_infer.1']
    #allocation4 [shape = 'u8[16384]{0}', space=vmem, size = 0x4000, scoped, tag = 'input window, operand 1, single buffered']
    #allocation5 [shape = 's32[1]{0}', space=sflag, size = 0x4, scoped, tag = 'scoped memory for crlr_infer.1']
    %7 = vsyncpa [#allocation3], 0
    %8 = vsyncpa [#allocation5], 0
    // Predicated region
    $region2: #{crlr_infer.1} parent=1 // pred_check
      _
    $region3: #{crlr_infer.1} parent=1 // pred_check_branch
      %10 = sbr.rel (0) target = $region5
    $region4: #{crlr_infer.1} parent=1 // pred_region
      %s12 = ssub.s32 128, 128
      %13 = vsyncadd [#allocation3], %s12
      %s15 = sshll.u32 [#allocation2], 4
      %s16 = int_to_ptr.vmem [resolvable:$true] %s15
      %18 = dma.hbm_to_vmem [thread:$0]  %s0, 128, %s16, [#allocation3]
    $region5: #{crlr_infer.1} parent=1 // pred_fallthru
      _
    // Predicated region
    $region6: #{crlr_infer.1} parent=1 // pred_check
      _
    $region7: #{crlr_infer.1} parent=1 // pred_check_branch
      %20 = sbr.rel (0) target = $region9
    $region8: #{crlr_infer.1} parent=1 // pred_region
      %s22 = ssub.s32 512, 512
      %23 = vsyncadd [#allocation5], %s22
      %s24 = sshll.u32 [#allocation4], 4
      %s25 = int_to_ptr.vmem [resolvable:$true] %s24
      %30 = dma.hbm_to_vmem [thread:$0]  %s1, 512, %s25, [#allocation5], 128, 128, 8
    $region9: #{crlr_infer.1} parent=1 // pred_fallthru
      _
    // Predicated region
    $region10: #{crlr_infer.1} parent=1 // pred_check
      _
    $region11: #{crlr_infer.1} parent=1 // pred_check_branch
      %32 = sbr.rel (0) target = $region13
    $region12: #{crlr_infer.1} parent=1 // pred_region
      %33 = dma.done [#allocation3], 128
    $region13: #{crlr_infer.1} parent=1 // pred_fallthru
      _
    // Predicated region
    $region14: #{crlr_infer.1} parent=1 // pred_check
      _
    $region15: #{crlr_infer.1} parent=1 // pred_check_branch
      %35 = sbr.rel (0) target = $region17
    $region16: #{crlr_infer.1} parent=1 // pred_region
      %36 = dma.done [#allocation5], 512
    $region17: #{crlr_infer.1} parent=1 // pred_fallthru
      _
    %v37 = vld [vmem:[#allocation2] sm:$0xff]
    %v38 = vld [vmem:[#allocation4] sm:$0xff]
    %v39 = vld [vmem:[#allocation4 + $0x8] sm:$0xff]
    %v40 = vld [vmem:[#allocation4 + $0x10] sm:$0xff]
    %v41 = vld [vmem:[#allocation4 + $0x18] sm:$0xff]
    %vm42 = vcmask 261120
    %v44 = vsel %vm42, %v37, 0
    %46 = vmatprep.subr.mxu0 0.0
    %47 = vmatpush1.msra.mxu0 0.0
    %48 = vmatprep.subr.mxu0 0.0
    %49 = vmatpush1.msra.mxu0 0.0
    %50 = vmatprep.subr.mxu0 0.0
    %51 = vmatpush1.msra.mxu0 0.0
    %52 = vmatprep.subr.mxu0 0.0
    %53 = vmatpush1.msra.mxu0 0.0
    %54 = vmatprep.subr.mxu0 0.0
    %55 = vmatpush1.msra.mxu0 0.0
    %56 = vmatprep.subr.mxu0 0.0
    %57 = vmatpush1.msra.mxu0 0.0
    %58 = vmatprep.subr.mxu0 0.0
    %59 = vmatpush1.msra.mxu0 0.0
    %60 = vmatprep.subr.mxu0 0.0
    %61 = vmatpush1.msra.mxu0 0.0
    %62 = vmatprep.subr.mxu0 0.0
    %63 = vmatpush1.msra.mxu0 0.0
    %64 = vmatprep.subr.mxu0 0.0
    %65 = vmatpush1.msra.mxu0 0.0
    %66 = vmatprep.subr.mxu0 0.0
    %67 = vmatpush1.msra.mxu0 0.0
    %68 = vmatprep.subr.mxu0 0.0
    %69 = vmatpush1.msra.mxu0 0.0
    %70 = vmatprep.subr.mxu0 0.0
    %71 = vmatpush1.msra.mxu0 %v41
    %72 = vmatprep.subr.mxu0 0.0
    %73 = vmatpush1.msra.mxu0 %v40
    %74 = vmatprep.subr.mxu0 0.0
    %75 = vmatpush1.msra.mxu0 %v39
    %76 = vmatprep.subr.mxu0 0.0
    %77 = vmatpush1.msra.mxu0 %v38
    %78 = vmatprep.subr.mxu0 0.0
    %79 = vmatpush2.msra.mxu0 0.0
    %80 = vmatprep.subr.mxu0 0.0
    %81 = vmatpush2.msra.mxu0 0.0
    %82 = vmatprep.subr.mxu0 0.0
    %83 = vmatpush2.msra.mxu0 0.0
    %84 = vmatprep.subr.mxu0 0.0
    %85 = vmatpush2.msra.mxu0 0.0
    %86 = vmatprep.subr.mxu0 0.0
    %87 = vmatpush2.msra.mxu0 0.0
    %88 = vmatprep.subr.mxu0 0.0
    %89 = vmatpush2.msra.mxu0 0.0
    %90 = vmatprep.subr.mxu0 0.0
    %91 = vmatpush2.msra.mxu0 0.0
    %92 = vmatprep.subr.mxu0 0.0
    %93 = vmatpush2.msra.mxu0 0.0
    %94 = vmatprep.subr.mxu0 0.0
    %95 = vmatpush2.msra.mxu0 0.0
    %96 = vmatprep.subr.mxu0 0.0
    %97 = vmatpush2.msra.mxu0 0.0
    %98 = vmatprep.subr.mxu0 0.0
    %99 = vmatpush2.msra.mxu0 0.0
    %100 = vmatprep.subr.mxu0 0.0
    %101 = vmatpush2.msra.mxu0 0.0
    %102 = vmatprep.subr.mxu0 0.0
    %103 = vmatpush2.msra.mxu0 0.0
    %104 = vmatprep.subr.mxu0 0.0
    %105 = vmatpush2.msra.mxu0 0.0
    %106 = vmatprep.subr.mxu0 0.0
    %107 = vmatpush2.msra.mxu0 0.0
    %108 = vmatprep.subr.mxu0 0.0
    %109 = vmatpush2.msra.mxu0 0.0
    %110 = vmatprep.mubr.f32.mxu0 0.0
    %111 = vmatmul.mubr.f32.gmra.mxu0 %v44
    %v112 = vpop.f32.mrf.mxu0
    %v113 = vadd.f32 0.0, %v112
    %v114 = vpop.f32.mrf.mxu0
    %115 = vdwg.mxu0
    %v116 = vlaneseq
    %v117 = vand.u32 %v116, 127
    %vm118 = vcmp.lt.s32.totalorder %v117, 4
    %v119 = vsel %vm118, %v113, -inf
    %120 = vmax.xlane.f32.xlu0 %v119
    %v121 = vpop.xlane.xlu0 %120
    %v122 = vsub.f32 %v119, %v121
    %v123 = vmul.f32 %v122, 1.442695
    %v124 = vpow.pop %v123
    %125 = vadd.xlane.f32.xlu0 %v124
    %v126 = vpop.xlane.xlu0 %125
    %v127 = vrcp.pop %v126
    %v128 = vmul.f32 %v124, %v127
    %129 = vst [vmem:[%s2] sm:$0xff] %v128
    // Predicated region
    $region18: #{crlr_infer.1} parent=1 // pred_check
      _
    $region19: #{crlr_infer.1} parent=1 // pred_check_branch
      %131 = sbr.rel (0) target = $region21
    $region20: #{crlr_infer.1} parent=1 // pred_region
      _
    $region21: #{crlr_infer.1} parent=1 // pred_fallthru
      _
    // Predicated region
    $region22: #{crlr_infer.1} parent=1 // pred_check
      _
    $region23: #{crlr_infer.1} parent=1 // pred_check_branch
      %133 = sbr.rel (0) target = $region25
    $region24: #{crlr_infer.1} parent=1 // pred_region
      _
    $region25: #{crlr_infer.1} parent=1 // pred_fallthru
      _
    %134 = vsyncpa [#allocation3], 1
    %135 = vsyncpa [#allocation5], 1

</llo_original>
